<compile_context>
chip_gen: v6e
topology: v6e:2x2x1
jax: 0.10.0
libtpu: 0.0.40
codegen_flags: <defaults>
</compile_context>

<pallas_src>
import functools

import jax
import jax.numpy as jnp
from jax import lax
from jax.experimental import pallas as pl
from jax.experimental.pallas import tpu as pltpu

LANES = 128


def _round_up(x, m):
    return ((x + m - 1) // m) * m


def _sublane_multiple(dtype):
    # native sublane tiling: 8 for 4-byte, 16 for 2-byte, 32 for 1-byte dtypes
    return max(8, 32 // jnp.dtype(dtype).itemsize)


def _docunet_partial_sums_kernel(y1_ref, y2_ref, lab_ref, out_ref, *,
                                 n_elems, rows_per_tile, steps, needs_mask):
    s = pl.program_id(0)   # parallel split (TensorCore shard on v7x)
    i = pl.program_id(1)   # sequential step within the split

    @pl.when(i == 0)
    def _():
        out_ref[...] = jnp.zeros_like(out_ref)

    y1 = y1_ref[...].astype(jnp.float32)
    y2 = y2_ref[...].astype(jnp.float32)
    lab = lab_ref[...].astype(jnp.float32)

    d1 = y1 - lab
    d2 = y2 - lab

    if needs_mask:
        # Zero out lanes past the true element count (covers both the
        # zero-pad region and any out-of-bounds garbage of a ragged tile).
        block_row0 = (s * steps + i) * rows_per_tile
        row_idx = lax.broadcasted_iota(jnp.int32, (rows_per_tile, LANES), 0)
        lane_idx = lax.broadcasted_iota(jnp.int32, (rows_per_tile, LANES), 1)
        elem_idx = (block_row0 + row_idx) * LANES + lane_idx
        valid = elem_idx < n_elems
        d1 = jnp.where(valid, d1, 0.0)
        d2 = jnp.where(valid, d2, 0.0)

    groups = rows_per_tile // 8

    def vsum(x):
        # (rows, 128) -> (rows/8, 8, 128), reduce leading axis: pure VPU adds
        # into an (8, 128) vreg-shaped partial; no XLU cross-lane reduction.
        return jnp.sum(x.reshape(groups, 8, LANES), axis=0)

    out_ref[0] += vsum(jnp.abs(d1))
    out_ref[1] += vsum(d1)
    out_ref[2] += vsum(d1 * d1)
    out_ref[3] += vsum(jnp.abs(d2))
    out_ref[4] += vsum(d2)
    out_ref[5] += vsum(d2 * d2)


def docunet_loss(y1, y2, label, r=0.1, rows_per_tile=1024, num_splits=2):
    assert y1.shape == y2.shape == label.shape
    n_elems = int(y1.size)
    assert n_elems > 0

    sub = max(_sublane_multiple(x.dtype) for x in (y1, y2, label))
    padded = _round_up(n_elems, sub * LANES)

    def as_rows(x):
        flat = x.reshape(-1)                       # native dtype, no f32 cast
        if padded != n_elems:
            flat = jnp.pad(flat, (0, padded - n_elems))
        return flat.reshape(-1, LANES)

    y1f, y2f, labf = as_rows(y1), as_rows(y2), as_rows(label)
    rows = y1f.shape[0]                            # multiple of `sub`

    rpt = min(_round_up(rows_per_tile, sub), rows)
    tiles = pl.cdiv(rows, rpt)
    splits = num_splits if (num_splits > 0 and tiles % num_splits == 0) else 1
    steps = tiles // splits
    needs_mask = (rows % rpt) != 0                 # ragged last tile only

    kernel = functools.partial(
        _docunet_partial_sums_kernel,
        n_elems=n_elems, rows_per_tile=rpt, steps=steps, needs_mask=needs_mask)

    in_spec = pl.BlockSpec((rpt, LANES), lambda s, i: (s * steps + i, 0))
    out_spec = pl.BlockSpec((None, 6, 8, LANES), lambda s, i: (s, 0, 0, 0))

    partials = pl.pallas_call(
        kernel,
        out_shape=jax.ShapeDtypeStruct((splits, 6, 8, LANES), jnp.float32),
        grid_spec=pltpu.PrefetchScalarGridSpec(
            num_scalar_prefetch=0,
            grid=(splits, steps),
            in_specs=[in_spec, in_spec, in_spec],
            out_specs=out_spec,
        ),
        compiler_params=pltpu.CompilerParams(
            dimension_semantics=("parallel", "arbitrary")),
    )(y1f, y2f, labf)

    # Tiny epilogue: combine per-split / per-lane partial sums into the loss.
    sums = jnp.sum(partials, axis=(0, 2, 3), dtype=jnp.float32)   # (6,)
    inv_n = jnp.float32(1.0 / n_elems)
    rr = jnp.float32(r)
    lossf1 = sums[0] * inv_n - rr * jnp.abs(sums[1] * inv_n)
    lossf2 = sums[3] * inv_n - rr * jnp.abs(sums[4] * inv_n)
    return sums[2] * inv_n + lossf1 + sums[5] * inv_n + lossf2


def docunet_loss_ref(y1, y2, label, r=0.1):
    y1 = y1.astype(jnp.float32)
    y2 = y2.astype(jnp.float32)
    label = label.astype(jnp.float32)
    d1 = y1 - label
    lossf1 = jnp.mean(jnp.abs(d1)) - r * jnp.abs(jnp.mean(d1))
    d2 = y2 - label
    lossf2 = jnp.mean(jnp.abs(d2)) - r * jnp.abs(jnp.mean(d2))
    mse1 = jnp.mean((y1 - label) ** 2)
    mse2 = jnp.mean((y2 - label) ** 2)
    return mse1 + lossf1 + mse2 + lossf2


if __name__ == "__main__":
    key = jax.random.PRNGKey(0)
    k1, k2, k3 = jax.random.split(key, 3)

    # Small NCHW-like case (single aligned tile, unmasked fast path).
    shape = (2, 4, 16, 16)
    y1 = jax.random.normal(k1, shape, dtype=jnp.float32)
    y2 = jax.random.normal(k2, shape, dtype=jnp.float32)
    label = jax.random.normal(k3, shape, dtype=jnp.float32)

    out = jax.block_until_ready(docunet_loss(y1, y2, label, r=0.1))
    ref = docunet_loss_ref(y1, y2, label, r=0.1)
    assert jnp.allclose(out, ref, rtol=1e-5, atol=1e-5), (out, ref)

    # Larger non-aligned case exercising the ragged-tail mask and the
    # 2-way parallel (dual-TensorCore on v7x) split path.
    shape2 = (2, 4, 130, 130)
    y1b = jax.random.normal(k1, shape2, dtype=jnp.float32)
    y2b = jax.random.normal(k2, shape2, dtype=jnp.float32)
    labelb = jax.random.normal(k3, shape2, dtype=jnp.float32)
    out2 = jax.block_until_ready(docunet_loss(y1b, y2b, labelb, r=0.1))
    ref2 = docunet_loss_ref(y1b, y2b, labelb, r=0.1)
    assert jnp.allclose(out2, ref2, rtol=1e-5, atol=1e-5), (out2, ref2)

    print("KERNEL_OK")
</pallas_src>

<mosaic_0001>
module attributes {stable_mosaic.version = 11 : i64} {
  func.func @_docunet_partial_sums_kernel(%arg0: i32, %arg1: i32, %arg2: memref<16x128xf32, #tpu.memory_space<vmem>>, %arg3: memref<16x128xf32, #tpu.memory_space<vmem>>, %arg4: memref<16x128xf32, #tpu.memory_space<vmem>>, %arg5: memref<1x6x8x128xf32, #tpu.memory_space<vmem>>) attributes {dimension_semantics = [#tpu.dimension_semantics<parallel>, #tpu.dimension_semantics<arbitrary>], iteration_bounds = array<i64: 1, 1>, scalar_prefetch = 0 : i64, scratch_operands = 0 : i64, tpu.core_type = #tpu.core_type<tc>, window_params = [{transform_indices = @transform_0, window_bounds = array<i64: 16, 128>}, {transform_indices = @transform_1, window_bounds = array<i64: 16, 128>}, {transform_indices = @transform_2, window_bounds = array<i64: 16, 128>}, {transform_indices = @transform_3, window_bounds = array<i64: 1, 6, 8, 128>}]} {
    %c0_i32 = arith.constant 0 : i32
    %0 = arith.cmpi eq, %arg1, %c0_i32 : i32
    %1 = arith.extui %0 : i1 to i32
    %c0_i32_0 = arith.constant 0 : i32
    %2 = arith.cmpi ne, %1, %c0_i32_0 : i32
    scf.if %2 {
      %cst_54 = arith.constant 0.000000e+00 : f32
      %60 = vector.broadcast %cst_54 : f32 to vector<6x8x128xf32>
      %c0_55 = arith.constant 0 : index
      %c0_56 = arith.constant 0 : index
      %c0_57 = arith.constant 0 : index
      %c0_58 = arith.constant 0 : index
      %61 = vector.load %arg5[%c0_55, %c0_56, %c0_57, %c0_58] : memref<1x6x8x128xf32, #tpu.memory_space<vmem>>, vector<1x6x8x128xf32>
      %62 = vector.shape_cast %61 : vector<1x6x8x128xf32> to vector<6x8x128xf32>
      %63 = vector.shape_cast %60 : vector<6x8x128xf32> to vector<1x6x8x128xf32>
      tpu.vector_store %arg5[%c0_55, %c0_56, %c0_57, %c0_58], %63 {strides = array<i32>} : memref<1x6x8x128xf32, #tpu.memory_space<vmem>>, vector<1x6x8x128xf32>,
    } else {
    }
    %c0 = arith.constant 0 : index
    %c0_1 = arith.constant 0 : index
    %3 = vector.load %arg2[%c0, %c0_1] : memref<16x128xf32, #tpu.memory_space<vmem>>, vector<16x128xf32>
    %c0_2 = arith.constant 0 : index
    %c0_3 = arith.constant 0 : index
    %4 = vector.load %arg3[%c0_2, %c0_3] : memref<16x128xf32, #tpu.memory_space<vmem>>, vector<16x128xf32>
    %c0_4 = arith.constant 0 : index
    %c0_5 = arith.constant 0 : index
    %5 = vector.load %arg4[%c0_4, %c0_5] : memref<16x128xf32, #tpu.memory_space<vmem>>, vector<16x128xf32>
    %6 = arith.subf %3, %5 : vector<16x128xf32>
    %7 = arith.subf %4, %5 : vector<16x128xf32>
    %c0_6 = arith.constant 0 : index
    %c0_7 = arith.constant 0 : index
    %c0_8 = arith.constant 0 : index
    %c0_9 = arith.constant 0 : index
    %8 = vector.load %arg5[%c0_6, %c0_7, %c0_8, %c0_9] : memref<1x6x8x128xf32, #tpu.memory_space<vmem>>, vector<1x1x8x128xf32>
    %9 = vector.shape_cast %8 : vector<1x1x8x128xf32> to vector<8x128xf32>
    %10 = math.absf %6 : vector<16x128xf32>
    %11 = vector.shape_cast %10 : vector<16x128xf32> to vector<2x8x128xf32>
    %cst = arith.constant dense<0.000000e+00> : vector<8x128xf32>
    %12 = vector.multi_reduction <add>, %11, %cst [0] : vector<2x8x128xf32> to vector<8x128xf32>
    %13 = arith.addf %9, %12 : vector<8x128xf32>
    %c0_10 = arith.constant 0 : index
    %c0_11 = arith.constant 0 : index
    %c0_12 = arith.constant 0 : index
    %c0_13 = arith.constant 0 : index
    %14 = vector.load %arg5[%c0_10, %c0_11, %c0_12, %c0_13] : memref<1x6x8x128xf32, #tpu.memory_space<vmem>>, vector<1x1x8x128xf32>
    %15 = vector.shape_cast %14 : vector<1x1x8x128xf32> to vector<8x128xf32>
    %16 = vector.shape_cast %13 : vector<8x128xf32> to vector<1x1x8x128xf32>
    tpu.vector_store %arg5[%c0_10, %c0_11, %c0_12, %c0_13], %16 {strides = array<i32>} : memref<1x6x8x128xf32, #tpu.memory_space<vmem>>, vector<1x1x8x128xf32>,
    %c0_14 = arith.constant 0 : index
    %c1 = arith.constant 1 : index
    %c0_15 = arith.constant 0 : index
    %c0_16 = arith.constant 0 : index
    %17 = vector.load %arg5[%c0_14, %c1, %c0_15, %c0_16] : memref<1x6x8x128xf32, #tpu.memory_space<vmem>>, vector<1x1x8x128xf32>
    %18 = vector.shape_cast %17 : vector<1x1x8x128xf32> to vector<8x128xf32>
    %19 = vector.shape_cast %6 : vector<16x128xf32> to vector<2x8x128xf32>
    %cst_17 = arith.constant dense<0.000000e+00> : vector<8x128xf32>
    %20 = vector.multi_reduction <add>, %19, %cst_17 [0] : vector<2x8x128xf32> to vector<8x128xf32>
    %21 = arith.addf %18, %20 : vector<8x128xf32>
    %c0_18 = arith.constant 0 : index
    %c1_19 = arith.constant 1 : index
    %c0_20 = arith.constant 0 : index
    %c0_21 = arith.constant 0 : index
    %22 = vector.load %arg5[%c0_18, %c1_19, %c0_20, %c0_21] : memref<1x6x8x128xf32, #tpu.memory_space<vmem>>, vector<1x1x8x128xf32>
    %23 = vector.shape_cast %22 : vector<1x1x8x128xf32> to vector<8x128xf32>
    %24 = vector.shape_cast %21 : vector<8x128xf32> to vector<1x1x8x128xf32>
    tpu.vector_store %arg5[%c0_18, %c1_19, %c0_20, %c0_21], %24 {strides = array<i32>} : memref<1x6x8x128xf32, #tpu.memory_space<vmem>>, vector<1x1x8x128xf32>,
    %c0_22 = arith.constant 0 : index
    %c2 = arith.constant 2 : index
    %c0_23 = arith.constant 0 : index
    %c0_24 = arith.constant 0 : index
    %25 = vector.load %arg5[%c0_22, %c2, %c0_23, %c0_24] : memref<1x6x8x128xf32, #tpu.memory_space<vmem>>, vector<1x1x8x128xf32>
    %26 = vector.shape_cast %25 : vector<1x1x8x128xf32> to vector<8x128xf32>
    %27 = arith.mulf %6, %6 : vector<16x128xf32>
    %28 = vector.shape_cast %27 : vector<16x128xf32> to vector<2x8x128xf32>
    %cst_25 = arith.constant dense<0.000000e+00> : vector<8x128xf32>
    %29 = vector.multi_reduction <add>, %28, %cst_25 [0] : vector<2x8x128xf32> to vector<8x128xf32>
    %30 = arith.addf %26, %29 : vector<8x128xf32>
    %c0_26 = arith.constant 0 : index
    %c2_27 = arith.constant 2 : index
    %c0_28 = arith.constant 0 : index
    %c0_29 = arith.constant 0 : index
    %31 = vector.load %arg5[%c0_26, %c2_27, %c0_28, %c0_29] : memref<1x6x8x128xf32, #tpu.memory_space<vmem>>, vector<1x1x8x128xf32>
    %32 = vector.shape_cast %31 : vector<1x1x8x128xf32> to vector<8x128xf32>
    %33 = vector.shape_cast %30 : vector<8x128xf32> to vector<1x1x8x128xf32>
    tpu.vector_store %arg5[%c0_26, %c2_27, %c0_28, %c0_29], %33 {strides = array<i32>} : memref<1x6x8x128xf32, #tpu.memory_space<vmem>>, vector<1x1x8x128xf32>,
    %c0_30 = arith.constant 0 : index
    %c3 = arith.constant 3 : index
    %c0_31 = arith.constant 0 : index
    %c0_32 = arith.constant 0 : index
    %34 = vector.load %arg5[%c0_30, %c3, %c0_31, %c0_32] : memref<1x6x8x128xf32, #tpu.memory_space<vmem>>, vector<1x1x8x128xf32>
    %35 = vector.shape_cast %34 : vector<1x1x8x128xf32> to vector<8x128xf32>
    %36 = math.absf %7 : vector<16x128xf32>
    %37 = vector.shape_cast %36 : vector<16x128xf32> to vector<2x8x128xf32>
    %cst_33 = arith.constant dense<0.000000e+00> : vector<8x128xf32>
    %38 = vector.multi_reduction <add>, %37, %cst_33 [0] : vector<2x8x128xf32> to vector<8x128xf32>
    %39 = arith.addf %35, %38 : vector<8x128xf32>
    %c0_34 = arith.constant 0 : index
    %c3_35 = arith.constant 3 : index
    %c0_36 = arith.constant 0 : index
    %c0_37 = arith.constant 0 : index
    %40 = vector.load %arg5[%c0_34, %c3_35, %c0_36, %c0_37] : memref<1x6x8x128xf32, #tpu.memory_space<vmem>>, vector<1x1x8x128xf32>
    %41 = vector.shape_cast %40 : vector<1x1x8x128xf32> to vector<8x128xf32>
    %42 = vector.shape_cast %39 : vector<8x128xf32> to vector<1x1x8x128xf32>
    tpu.vector_store %arg5[%c0_34, %c3_35, %c0_36, %c0_37], %42 {strides = array<i32>} : memref<1x6x8x128xf32, #tpu.memory_space<vmem>>, vector<1x1x8x128xf32>,
    %c0_38 = arith.constant 0 : index
    %c4 = arith.constant 4 : index
    %c0_39 = arith.constant 0 : index
    %c0_40 = arith.constant 0 : index
    %43 = vector.load %arg5[%c0_38, %c4, %c0_39, %c0_40] : memref<1x6x8x128xf32, #tpu.memory_space<vmem>>, vector<1x1x8x128xf32>
    %44 = vector.shape_cast %43 : vector<1x1x8x128xf32> to vector<8x128xf32>
    %45 = vector.shape_cast %7 : vector<16x128xf32> to vector<2x8x128xf32>
    %cst_41 = arith.constant dense<0.000000e+00> : vector<8x128xf32>
    %46 = vector.multi_reduction <add>, %45, %cst_41 [0] : vector<2x8x128xf32> to vector<8x128xf32>
    %47 = arith.addf %44, %46 : vector<8x128xf32>
    %c0_42 = arith.constant 0 : index
    %c4_43 = arith.constant 4 : index
    %c0_44 = arith.constant 0 : index
    %c0_45 = arith.constant 0 : index
    %48 = vector.load %arg5[%c0_42, %c4_43, %c0_44, %c0_45] : memref<1x6x8x128xf32, #tpu.memory_space<vmem>>, vector<1x1x8x128xf32>
    %49 = vector.shape_cast %48 : vector<1x1x8x128xf32> to vector<8x128xf32>
    %50 = vector.shape_cast %47 : vector<8x128xf32> to vector<1x1x8x128xf32>
    tpu.vector_store %arg5[%c0_42, %c4_43, %c0_44, %c0_45], %50 {strides = array<i32>} : memref<1x6x8x128xf32, #tpu.memory_space<vmem>>, vector<1x1x8x128xf32>,
    %c0_46 = arith.constant 0 : index
    %c5 = arith.constant 5 : index
    %c0_47 = arith.constant 0 : index
    %c0_48 = arith.constant 0 : index
    %51 = vector.load %arg5[%c0_46, %c5, %c0_47, %c0_48] : memref<1x6x8x128xf32, #tpu.memory_space<vmem>>, vector<1x1x8x128xf32>
    %52 = vector.shape_cast %51 : vector<1x1x8x128xf32> to vector<8x128xf32>
    %53 = arith.mulf %7, %7 : vector<16x128xf32>
    %54 = vector.shape_cast %53 : vector<16x128xf32> to vector<2x8x128xf32>
    %cst_49 = arith.constant dense<0.000000e+00> : vector<8x128xf32>
    %55 = vector.multi_reduction <add>, %54, %cst_49 [0] : vector<2x8x128xf32> to vector<8x128xf32>
    %56 = arith.addf %52, %55 : vector<8x128xf32>
    %c0_50 = arith.constant 0 : index
    %c5_51 = arith.constant 5 : index
    %c0_52 = arith.constant 0 : index
    %c0_53 = arith.constant 0 : index
    %57 = vector.load %arg5[%c0_50, %c5_51, %c0_52, %c0_53] : memref<1x6x8x128xf32, #tpu.memory_space<vmem>>, vector<1x1x8x128xf32>
    %58 = vector.shape_cast %57 : vector<1x1x8x128xf32> to vector<8x128xf32>
    %59 = vector.shape_cast %56 : vector<8x128xf32> to vector<1x1x8x128xf32>
    tpu.vector_store %arg5[%c0_50, %c5_51, %c0_52, %c0_53], %59 {strides = array<i32>} : memref<1x6x8x128xf32, #tpu.memory_space<vmem>>, vector<1x1x8x128xf32>,
    return
  }
  func.func @transform_0(%arg0: i32, %arg1: i32) -> (i32, i32) {
    %c1_i32 = arith.constant 1 : i32
    %0 = arith.muli %arg0, %c1_i32 : i32
    %1 = arith.addi %0, %arg1 : i32
    %c0_i32 = arith.constant 0 : i32
    %c0_i32_0 = arith.constant 0 : i32
    return %1, %c0_i32 : i32, i32
  }
  func.func @transform_1(%arg0: i32, %arg1: i32) -> (i32, i32) {
    %c1_i32 = arith.constant 1 : i32
    %0 = arith.muli %arg0, %c1_i32 : i32
    %1 = arith.addi %0, %arg1 : i32
    %c0_i32 = arith.constant 0 : i32
    %c0_i32_0 = arith.constant 0 : i32
    return %1, %c0_i32 : i32, i32
  }
  func.func @transform_2(%arg0: i32, %arg1: i32) -> (i32, i32) {
    %c1_i32 = arith.constant 1 : i32
    %0 = arith.muli %arg0, %c1_i32 : i32
    %1 = arith.addi %0, %arg1 : i32
    %c0_i32 = arith.constant 0 : i32
    %c0_i32_0 = arith.constant 0 : i32
    return %1, %c0_i32 : i32, i32
  }
  func.func @transform_3(%arg0: i32, %arg1: i32) -> (i32, i32, i32, i32) {
    %c0_i32 = arith.constant 0 : i32
    %c0_i32_0 = arith.constant 0 : i32
    %c0_i32_1 = arith.constant 0 : i32
    %c0_i32_2 = arith.constant 0 : i32
    return %arg0, %c0_i32, %c0_i32_0, %c0_i32_1 : i32, i32, i32, i32
  }
}

</mosaic_0001>

<llo_original>
// kernel: tpu_custom_call.1
$region0: #{tpu_custom_call.1}
  #allocation0 [shape = 'u32[]', space=smem, size = 0x4, offset = 0x4, fixed_abs, tag = 'smem constant byte address 0x4 - core index']
  #allocation1 [shape = 'u32[144,128]{1,0:T(1,128)}', space=vmem, size = 0x12000, scoped, tag = 'internal scratch']
  %s0 = inlined_call_operand.hbm [shape: f32[16,128], index: 0, kind: input, shape index: {}]
  %s1 = inlined_call_operand.hbm [shape: f32[16,128], index: 1, kind: input, shape index: {}]
  %s2 = inlined_call_operand.hbm [shape: f32[16,128], index: 2, kind: input, shape index: {}]
  %s3 = inlined_call_operand.hbm [shape: f32[1,6,8,128], index: 3, kind: output, shape index: {}]
  %s4 = sld [smem:[#allocation0]]
  $region38: #{tpu_custom_call.1} parent=0
    _
  %s6 = ssub.s32 1, %s4
  %s7 = scalar_select 0, %s6, %s4
  $region1: #{tpu_custom_call.1} parent=0
    #allocation2 [shape = 'u8[8192]{0}', space=vmem, size = 0x2000, scoped, tag = 'input window, operand 0, single buffered']
    #allocation3 [shape = 's32[1]{0}', space=sflag, size = 0x4, scoped, tag = 'scoped memory for tpu_custom_call.1']
    #allocation4 [shape = 's32[1]{0}', space=sflag, size = 0x4, scoped, tag = 'scoped memory for tpu_custom_call.1']
    #allocation5 [shape = 'u8[8192]{0}', space=vmem, size = 0x2000, scoped, tag = 'input window, operand 1, single buffered']
    #allocation6 [shape = 's32[1]{0}', space=sflag, size = 0x4, scoped, tag = 'scoped memory for tpu_custom_call.1']
    #allocation7 [shape = 'u8[8192]{0}', space=vmem, size = 0x2000, scoped, tag = 'input window, operand 2, single buffered']
    #allocation8 [shape = 'u8[24576]{0}', space=vmem, size = 0x6000, scoped, tag = 'output window, operand 0, single buffered']
    %8 = vsyncpa [#allocation3], 0
    %9 = vsyncpa [#allocation6], 0
    %10 = vsyncpa [#allocation4], 0
    // Predicated region
    $region2: #{tpu_custom_call.1} parent=1 // pred_check
      _
    $region3: #{tpu_custom_call.1} parent=1 // pred_check_branch
      %12 = sbr.rel (0) target = $region5
    $region4: #{tpu_custom_call.1} parent=1 // pred_region
      %s13 = sadd.s32 0, 0
      %s14 = smul.u32 2, %s13
      %s16 = ssub.s32 256, 256
      %17 = vsyncadd [#allocation3], %s16
      %s18 = smul.addr %s14, 128
      %s19 = scalar_lea.hbm %s0, %s18
      %s20 = sshll.u32 [#allocation2], 4
      %s21 = int_to_ptr.vmem [resolvable:$true] %s20
      %26 = dma.hbm_to_vmem [thread:$0]  %s19, 256, %s21, [#allocation3], 128, 128, 8
    $region5: #{tpu_custom_call.1} parent=1 // pred_fallthru
      _
    // Predicated region
    $region6: #{tpu_custom_call.1} parent=1 // pred_check
      _
    $region7: #{tpu_custom_call.1} parent=1 // pred_check_branch
      %28 = sbr.rel (0) target = $region9
    $region8: #{tpu_custom_call.1} parent=1 // pred_region
      %s29 = sadd.s32 0, 0
      %s30 = smul.u32 2, %s29
      %s32 = ssub.s32 256, 256
      %33 = vsyncadd [#allocation6], %s32
      %s34 = smul.addr %s30, 128
      %s35 = scalar_lea.hbm %s1, %s34
      %s36 = sshll.u32 [#allocation5], 4
      %s37 = int_to_ptr.vmem [resolvable:$true] %s36
      %42 = dma.hbm_to_vmem [thread:$0]  %s35, 256, %s37, [#allocation6], 128, 128, 8
    $region9: #{tpu_custom_call.1} parent=1 // pred_fallthru
      _
    // Predicated region
    $region10: #{tpu_custom_call.1} parent=1 // pred_check
      _
    $region11: #{tpu_custom_call.1} parent=1 // pred_check_branch
      %44 = sbr.rel (0) target = $region13
    $region12: #{tpu_custom_call.1} parent=1 // pred_region
      %s45 = sadd.s32 0, 0
      %s46 = smul.u32 2, %s45
      %s48 = ssub.s32 256, 256
      %49 = vsyncadd [#allocation6], %s48
      %s50 = smul.addr %s46, 128
      %s51 = scalar_lea.hbm %s2, %s50
      %s52 = sshll.u32 [#allocation7], 4
      %s53 = int_to_ptr.vmem [resolvable:$true] %s52
      %58 = dma.hbm_to_vmem [thread:$0]  %s51, 256, %s53, [#allocation6], 128, 128, 8
    $region13: #{tpu_custom_call.1} parent=1 // pred_fallthru
      _
    // Predicated region
    $region14: #{tpu_custom_call.1} parent=1 // pred_check
      _
    $region15: #{tpu_custom_call.1} parent=1 // pred_check_branch
      %60 = sbr.rel (0) target = $region17
    $region16: #{tpu_custom_call.1} parent=1 // pred_region
      %61 = dma.done [#allocation3], 256
    $region17: #{tpu_custom_call.1} parent=1 // pred_fallthru
      _
    // Predicated region
    $region18: #{tpu_custom_call.1} parent=1 // pred_check
      _
    $region19: #{tpu_custom_call.1} parent=1 // pred_check_branch
      %63 = sbr.rel (0) target = $region21
    $region20: #{tpu_custom_call.1} parent=1 // pred_region
      %64 = dma.done [#allocation6], 256
    $region21: #{tpu_custom_call.1} parent=1 // pred_fallthru
      _
    // Predicated region
    $region22: #{tpu_custom_call.1} parent=1 // pred_check
      _
    $region23: #{tpu_custom_call.1} parent=1 // pred_check_branch
      %66 = sbr.rel (0) target = $region25
    $region24: #{tpu_custom_call.1} parent=1 // pred_region
      %67 = dma.done [#allocation6], 256
    $region25: #{tpu_custom_call.1} parent=1 // pred_fallthru
      _
    %s68 = sadd.s32 0, 0
    %s69 = smul.u32 2, %s68
    %s70 = sadd.s32 0, 0
    %s71 = smul.u32 2, %s70
    %s72 = sadd.s32 0, 0
    %s73 = smul.u32 2, %s72
    %p74 = scmp.eq.s32.totalorder 0, 0
    // Predicated region
    $region26: #{tpu_custom_call.1} parent=1 // pred_check
      %p75 = pneg %p74
    $region27: #{tpu_custom_call.1} parent=1 // pred_check_branch
      %77 = sbr.rel (%p75) target = $region29
    $region28: #{tpu_custom_call.1} parent=1 // pred_region
      %78 = vst [vmem:[#allocation8] sm:$0xff] 0.0
      %79 = vst [vmem:[#allocation8 + $0x8] sm:$0xff] 0.0
      %80 = vst [vmem:[#allocation8 + $0x10] sm:$0xff] 0.0
      %81 = vst [vmem:[#allocation8 + $0x18] sm:$0xff] 0.0
      %82 = vst [vmem:[#allocation8 + $0x20] sm:$0xff] 0.0
      %83 = vst [vmem:[#allocation8 + $0x28] sm:$0xff] 0.0
    $region29: #{tpu_custom_call.1} parent=1 // pred_fallthru
      _
    %v84 = vld [vmem:[#allocation2] sm:$0xff]
    %v85 = vld [vmem:[#allocation2 + $0x8] sm:$0xff]
    %v86 = vld [vmem:[#allocation5] sm:$0xff]
    %v87 = vld [vmem:[#allocation5 + $0x8] sm:$0xff]
    %v88 = vld [vmem:[#allocation7] sm:$0xff]
    %v89 = vld [vmem:[#allocation7 + $0x8] sm:$0xff]
    %v90 = vsub.f32 %v84, %v88
    %v91 = vsub.f32 %v85, %v89
    %v92 = vsub.f32 %v86, %v88
    %v93 = vsub.f32 %v87, %v89
    %v94 = vld [vmem:[#allocation8] sm:$0xff]
    %v95 = vand.u32 2147483647, %v90
    %v96 = vand.u32 2147483647, %v91
    %v97 = vadd.f32 %v95, %v96
    %v98 = vadd.f32 %v94, %v97
    %99 = vst [vmem:[#allocation8] sm:$0xff] %v98
    %s100 = scalar_lea.vmem [#allocation8], 8
    %v101 = vld [vmem:[%s100] sm:$0xff]
    %v102 = vadd.f32 %v90, %v91
    %v103 = vadd.f32 %v101, %v102
    %104 = vst [vmem:[%s100] sm:$0xff] %v103
    %s105 = scalar_lea.vmem [#allocation8], 16
    %v106 = vld [vmem:[%s105] sm:$0xff]
    %v107 = vmul.f32 %v90, %v90
    %v108 = vmul.f32 %v91, %v91
    %v109 = vadd.f32 %v107, %v108
    %v110 = vadd.f32 %v106, %v109
    %111 = vst [vmem:[%s105] sm:$0xff] %v110
    %s112 = scalar_lea.vmem [#allocation8], 24
    %v113 = vld [vmem:[%s112] sm:$0xff]
    %v114 = vand.u32 2147483647, %v92
    %v115 = vand.u32 2147483647, %v93
    %v116 = vadd.f32 %v114, %v115
    %v117 = vadd.f32 %v113, %v116
    %118 = vst [vmem:[%s112] sm:$0xff] %v117
    %s119 = scalar_lea.vmem [#allocation8], 32
    %v120 = vld [vmem:[%s119] sm:$0xff]
    %v121 = vadd.f32 %v92, %v93
    %v122 = vadd.f32 %v120, %v121
    %123 = vst [vmem:[%s119] sm:$0xff] %v122
    %s124 = scalar_lea.vmem [#allocation8], 40
    %v125 = vld [vmem:[%s124] sm:$0xff]
    %v126 = vmul.f32 %v92, %v92
    %v127 = vmul.f32 %v93, %v93
    %v128 = vadd.f32 %v126, %v127
    %v129 = vadd.f32 %v125, %v128
    %130 = vst [vmem:[%s124] sm:$0xff] %v129
    // Predicated region
    $region30: #{tpu_custom_call.1} parent=1 // pred_check
      _
    $region31: #{tpu_custom_call.1} parent=1 // pred_check_branch
      %132 = sbr.rel (0) target = $region33
    $region32: #{tpu_custom_call.1} parent=1 // pred_region
      %s134 = ssub.s32 768, 768
      %135 = vsyncadd [#allocation4], %s134
      %s136 = sshll.u32 [#allocation8], 4
      %s137 = int_to_ptr.vmem [resolvable:$true] %s136
      %142 = dma.vmem_to_hbm [thread:$0]  %s137, 768, %s3, [#allocation4], 128, 128, 8
    $region33: #{tpu_custom_call.1} parent=1 // pred_fallthru
      _
    // Predicated region
    $region34: #{tpu_custom_call.1} parent=1 // pred_check
      _
    $region35: #{tpu_custom_call.1} parent=1 // pred_check_branch
      %144 = sbr.rel (0) target = $region37
    $region36: #{tpu_custom_call.1} parent=1 // pred_region
      %145 = dma.done [#allocation4], 768
    $region37: #{tpu_custom_call.1} parent=1 // pred_fallthru
      _
    %146 = vsyncpa [#allocation3], 1
    %147 = vsyncpa [#allocation6], 1
    %148 = vsyncpa [#allocation4], 1

</llo_original>
